<compile_context>
chip_gen: v5e
topology: v5e:2x2
jax: 0.10.0
libtpu: 0.0.40
codegen_flags: <defaults>
</compile_context>

<pallas_src>
import functools

import jax
import jax.numpy as jnp
from jax.experimental import pallas as pl
from jax.experimental.pallas import tpu as pltpu

_OUT_HW = 4   # AdaptiveAvgPool2d(4)
_EPS = 1e-7


def _reshape_f_kernel(x_ref, o_ref, *, bh: int, bw: int, inv_area: float):
    # x_ref: (TB, C, H, W)  -- one NCHW batch tile
    # o_ref: (TB, 16, C)    -- pooled rows (row order oh*4+ow), L2-normalized over C
    tb, c, _, w = x_ref.shape
    x = x_ref[...]

    # 4x4 adaptive average pool with uniform windows, accumulating in f32 without
    # materializing a full f32 copy of the block.
    hsum = jnp.sum(x.reshape(tb, c, _OUT_HW, bh, w), axis=3,
                   dtype=jnp.float32)                                   # (TB, C, 4, W)
    pooled = jnp.sum(hsum.reshape(tb, c, _OUT_HW, _OUT_HW, bw),
                     axis=4) * inv_area                                 # (TB, C, 4, 4)

    # Channel-last permute on the tiny pooled tensor; row order n*16 + oh*4 + ow
    # matches permute(0, 2, 3, 1).flatten(0, 2) of the pooled NCHW tensor.
    rows = jnp.transpose(pooled.reshape(tb, c, _OUT_HW * _OUT_HW),
                         (0, 2, 1))                                     # (TB, 16, C)

    # L2 normalize over channels; power=2 specialization: x*x + sqrt (no pow()).
    ssq = jnp.sum(rows * rows, axis=-1, keepdims=True)                  # (TB, 16, 1)
    inv_norm = pl.reciprocal(jnp.sqrt(ssq) + _EPS, approx=True)
    o_ref[...] = (rows * inv_norm).astype(o_ref.dtype)


def _pick_tile_b(n: int, c: int, h: int, w: int, itemsize: int) -> int:
    # DMA-bound kernel: target ~8 MiB per input block.  Double-buffered that is
    # ~16 MiB, comfortably under the 48 MiB VMEM limit requested below and safe
    # even on v7x's 64 MiB physical VMEM.  No megacore halving: blocks stay as
    # large as the budget allows.
    target_bytes = 8 * 1024 * 1024
    per_batch = max(1, c * h * w * itemsize)
    tb = max(1, target_bytes // per_batch)
    return int(min(tb, n))


def reshape_f(x: jax.Array, tile_b=None) -> jax.Array:
    """ReshapeF forward: AdaptiveAvgPool2d(4) + permute/flatten + L2 normalize.

    x: (N, C, H, W) -> (N*16, C)
    """
    n, c, h, w = x.shape
    if h % _OUT_HW != 0 or w % _OUT_HW != 0:
        # TODO(synk): support PyTorch's variable floor/ceil adaptive-pool windows when
        # H or W is not divisible by 4; uniform windows cover the CUT use case.
        raise NotImplementedError("reshape_f requires H and W divisible by 4")
    bh, bw = h // _OUT_HW, w // _OUT_HW

    if tile_b is None:
        tile_b = _pick_tile_b(n, c, h, w, jnp.dtype(x.dtype).itemsize)
    num_b = pl.cdiv(n, tile_b)   # ragged batch -> partial edge block, no jnp.pad

    kernel = functools.partial(_reshape_f_kernel, bh=bh, bw=bw,
                               inv_area=1.0 / float(bh * bw))
    out = pl.pallas_call(
        kernel,
        out_shape=jax.ShapeDtypeStruct((n, _OUT_HW * _OUT_HW, c), x.dtype),
        grid=(num_b,),
        in_specs=[pl.BlockSpec((tile_b, c, h, w), lambda i: (i, 0, 0, 0))],
        out_specs=pl.BlockSpec((tile_b, _OUT_HW * _OUT_HW, c), lambda i: (i, 0, 0)),
        compiler_params=pltpu.CompilerParams(
            dimension_semantics=("parallel",),
            vmem_limit_bytes=48 * 1024 * 1024,
        ),
    )(x)

    # (N, 16, C) -> (N*16, C): row n*16 + oh*4 + ow, channels fastest.
    return out.reshape(n * _OUT_HW * _OUT_HW, c)


def reshape_f_ref(x: jax.Array) -> jax.Array:
    """Pure-JAX reference matching the PyTorch module (divisible H/W)."""
    n, c, h, w = x.shape
    xf = x.astype(jnp.float32)
    pooled = xf.reshape(n, c, _OUT_HW, h // _OUT_HW, _OUT_HW, w // _OUT_HW).mean(axis=(3, 5))
    rows = jnp.transpose(pooled, (0, 2, 3, 1)).reshape(n * _OUT_HW * _OUT_HW, c)
    norm = jnp.sqrt(jnp.sum(rows * rows, axis=1, keepdims=True))
    return (rows / (norm + _EPS)).astype(x.dtype)


if __name__ == "__main__":
    key = jax.random.PRNGKey(0)
    # small shape consistent with the module: batch=2, channels=4, spatial 16x16
    x = jax.random.normal(key, (2, 4, 16, 16), dtype=jnp.float32)

    out = reshape_f(x)
    out = jax.block_until_ready(out)

    ref = reshape_f_ref(x)
    assert out.shape == (2 * 16, 4) and out.dtype == x.dtype
    # tolerance covers the approximate EUP reciprocal (~2^-12 relative error)
    assert jnp.allclose(out, ref, atol=2e-3, rtol=2e-3), "mismatch vs reference"

    print("KERNEL_OK")
</pallas_src>

<mosaic_0001>
module attributes {stable_mosaic.version = 11 : i64} {
  func.func @_reshape_f_kernel(%arg0: i32, %arg1: memref<2x4x16x16xf32, #tpu.memory_space<vmem>>, %arg2: memref<2x16x4xf32, #tpu.memory_space<vmem>>) attributes {dimension_semantics = [#tpu.dimension_semantics<parallel>], iteration_bounds = array<i64: 1>, scalar_prefetch = 0 : i64, scratch_operands = 0 : i64, tpu.core_type = #tpu.core_type<tc>, window_params = [{transform_indices = @transform_0, window_bounds = array<i64: 2, 4, 16, 16>}, {transform_indices = @transform_1, window_bounds = array<i64: 2, 16, 4>}]} {
    %c0 = arith.constant 0 : index
    %c0_0 = arith.constant 0 : index
    %c0_1 = arith.constant 0 : index
    %c0_2 = arith.constant 0 : index
    %0 = vector.load %arg1[%c0, %c0_0, %c0_1, %c0_2] : memref<2x4x16x16xf32, #tpu.memory_space<vmem>>, vector<2x4x16x16xf32>
    %1 = vector.shape_cast %0 : vector<2x4x16x16xf32> to vector<2x4x4x4x16xf32>
    %cst = arith.constant dense<0.000000e+00> : vector<2x4x4x16xf32>
    %2 = vector.multi_reduction <add>, %1, %cst [3] : vector<2x4x4x4x16xf32> to vector<2x4x4x16xf32>
    %3 = vector.shape_cast %2 : vector<2x4x4x16xf32> to vector<2x4x4x4x4xf32>
    %cst_3 = arith.constant dense<0.000000e+00> : vector<2x4x4x4xf32>
    %4 = vector.multi_reduction <add>, %3, %cst_3 [4] : vector<2x4x4x4x4xf32> to vector<2x4x4x4xf32>
    %cst_4 = arith.constant 6.250000e-02 : f32
    %5 = vector.broadcast %cst_4 : f32 to vector<2x4x4x4xf32>
    %6 = arith.mulf %4, %5 : vector<2x4x4x4xf32>
    %7 = vector.shape_cast %6 : vector<2x4x4x4xf32> to vector<2x4x16xf32>
    %8 = tpu.transpose %7, [0, 2, 1] : vector<2x4x16xf32> -> vector<2x16x4xf32>
    %9 = arith.mulf %8, %8 : vector<2x16x4xf32>
    %cst_5 = arith.constant dense<0.000000e+00> : vector<2x16xf32>
    %10 = vector.multi_reduction <add>, %9, %cst_5 [2] : vector<2x16x4xf32> to vector<2x16xf32>
    %11 = vector.shape_cast %10 : vector<2x16xf32> to vector<2x16x1xf32>
    %12 = math.sqrt %11 : vector<2x16x1xf32>
    %cst_6 = arith.constant 1.000000e-07 : f32
    %13 = vector.broadcast %cst_6 : f32 to vector<2x16x1xf32>
    %14 = arith.addf %12, %13 : vector<2x16x1xf32>
    %15 = tpu.reciprocal %14 {approx = true} : vector<2x16x1xf32> -> vector<2x16x1xf32>
    %16 = vector.broadcast %15 : vector<2x16x1xf32> to vector<2x16x4xf32>
    %17 = arith.mulf %8, %16 : vector<2x16x4xf32>
    %c0_7 = arith.constant 0 : index
    %c0_8 = arith.constant 0 : index
    %c0_9 = arith.constant 0 : index
    %18 = vector.load %arg2[%c0_7, %c0_8, %c0_9] : memref<2x16x4xf32, #tpu.memory_space<vmem>>, vector<2x16x4xf32>
    tpu.vector_store %arg2[%c0_7, %c0_8, %c0_9], %17 {strides = array<i32>} : memref<2x16x4xf32, #tpu.memory_space<vmem>>, vector<2x16x4xf32>,
    return
  }
  func.func @transform_0(%arg0: i32) -> (i32, i32, i32, i32) {
    %c0_i32 = arith.constant 0 : i32
    %c0_i32_0 = arith.constant 0 : i32
    %c0_i32_1 = arith.constant 0 : i32
    %c0_i32_2 = arith.constant 0 : i32
    return %arg0, %c0_i32, %c0_i32_0, %c0_i32_1 : i32, i32, i32, i32
  }
  func.func @transform_1(%arg0: i32) -> (i32, i32, i32) {
    %c0_i32 = arith.constant 0 : i32
    %c0_i32_0 = arith.constant 0 : i32
    %c0_i32_1 = arith.constant 0 : i32
    return %arg0, %c0_i32, %c0_i32_0 : i32, i32, i32
  }
}

</mosaic_0001>

<llo_original>
// kernel: tpu_custom_call.1
$region0: #{tpu_custom_call.1}
  #allocation0 [shape = 'u32[]', space=smem, size = 0x4, offset = 0x4, fixed_abs, tag = 'smem constant byte address 0x4 - core index']
  #allocation1 [shape = 'u32[72,128]{1,0:T(1,128)}', space=vmem, size = 0x9000, scoped, tag = 'internal scratch']
  %s0 = inlined_call_operand.hbm [shape: f32[2,4,16,16], index: 0, kind: input, shape index: {}]
  %s1 = inlined_call_operand.vmem [shape: f32[2,16,4], index: 1, kind: output, shape index: {}]
  %s2 = sld [smem:[#allocation0]]
  $region18: #{tpu_custom_call.1} parent=0
    _
  %s4 = ssub.s32 1, %s2
  %s5 = scalar_select 0, %s4, %s2
  $region1: #{tpu_custom_call.1} parent=0
    #allocation2 [shape = 'u8[65536]{0}', space=vmem, size = 0x10000, scoped, tag = 'input window, operand 0, single buffered']
    #allocation3 [shape = 's32[1]{0}', space=sflag, size = 0x4, scoped, tag = 'scoped memory for tpu_custom_call.1']
    %6 = vsyncpa [#allocation3], 0
    // Predicated region
    $region2: #{tpu_custom_call.1} parent=1 // pred_check
      _
    $region3: #{tpu_custom_call.1} parent=1 // pred_check_branch
      %8 = sbr.rel (0) target = $region5
    $region4: #{tpu_custom_call.1} parent=1 // pred_region
      %10 = vsyncadd [#allocation3], 0
      %s11 = sshll.u32 %s0, 4
      %s12 = int_to_ptr.hbm [resolvable:$true] %s11
      %s13 = sshll.u32 [#allocation2], 4
      %s14 = int_to_ptr.vmem [resolvable:$true] %s13
      %19 = dma.hbm_to_vmem [thread:$0]  %s12, 2048, %s14, [#allocation3], 128, 128, 8
    $region5: #{tpu_custom_call.1} parent=1 // pred_fallthru
      _
    // Predicated region
    $region6: #{tpu_custom_call.1} parent=1 // pred_check
      _
    $region7: #{tpu_custom_call.1} parent=1 // pred_check_branch
      %21 = sbr.rel (0) target = $region9
    $region8: #{tpu_custom_call.1} parent=1 // pred_region
      %23 = dma.done [#allocation3], 2048
    $region9: #{tpu_custom_call.1} parent=1 // pred_fallthru
      _
    %v24 = vld [vmem:[#allocation2] sm:$0xff]
    %v25 = vld [vmem:[#allocation2 + $0x8] sm:$0xff]
    %v26 = vld [vmem:[#allocation2 + $0x10] sm:$0xff]
    %v27 = vld [vmem:[#allocation2 + $0x18] sm:$0xff]
    %v28 = vld [vmem:[#allocation2 + $0x20] sm:$0xff]
    %v29 = vld [vmem:[#allocation2 + $0x28] sm:$0xff]
    %v30 = vld [vmem:[#allocation2 + $0x30] sm:$0xff]
    %v31 = vld [vmem:[#allocation2 + $0x38] sm:$0xff]
    %v32 = vld [vmem:[#allocation2 + $0x40] sm:$0xff]
    %v33 = vld [vmem:[#allocation2 + $0x48] sm:$0xff]
    %v34 = vld [vmem:[#allocation2 + $0x50] sm:$0xff]
    %v35 = vld [vmem:[#allocation2 + $0x58] sm:$0xff]
    %v36 = vld [vmem:[#allocation2 + $0x60] sm:$0xff]
    %v37 = vld [vmem:[#allocation2 + $0x68] sm:$0xff]
    %v38 = vld [vmem:[#allocation2 + $0x70] sm:$0xff]
    %v39 = vld [vmem:[#allocation2 + $0x78] sm:$0xff]
    %v56 = vrot.slane %v24, 4
    %v57 = vrot.slane %v25, 4
    %v58 = vrot.slane %v26, 4
    %v59 = vrot.slane %v27, 4
    %v60 = vrot.slane %v28, 4
    %v61 = vrot.slane %v29, 4
    %v62 = vrot.slane %v30, 4
    %v63 = vrot.slane %v31, 4
    %v64 = vrot.slane %v32, 4
    %v65 = vrot.slane %v33, 4
    %v66 = vrot.slane %v34, 4
    %v67 = vrot.slane %v35, 4
    %v68 = vrot.slane %v36, 4
    %v69 = vrot.slane %v37, 4
    %v70 = vrot.slane %v38, 4
    %v71 = vrot.slane %v39, 4
    %vm88 = vcmask 125952
    %v89 = vsel %vm88, %v24, 0.0
    %v90 = vrot.slane %v89, 4
    %v91 = vadd.f32 %v89, %v90
    %v92 = vrot.slane %v91, 2
    %v93 = vadd.f32 %v91, %v92
    %v94 = vrot.slane %v93, 1
    %v95 = vadd.f32 %v93, %v94
    %v96 = vsel %vm88, %v56, 0.0
    %v97 = vrot.slane %v96, 4
    %v98 = vadd.f32 %v96, %v97
    %v99 = vrot.slane %v98, 2
    %v100 = vadd.f32 %v98, %v99
    %v101 = vrot.slane %v100, 1
    %v102 = vadd.f32 %v100, %v101
    %v103 = vsel %vm88, %v25, 0.0
    %v104 = vrot.slane %v103, 4
    %v105 = vadd.f32 %v103, %v104
    %v106 = vrot.slane %v105, 2
    %v107 = vadd.f32 %v105, %v106
    %v108 = vrot.slane %v107, 1
    %v109 = vadd.f32 %v107, %v108
    %v110 = vsel %vm88, %v57, 0.0
    %v111 = vrot.slane %v110, 4
    %v112 = vadd.f32 %v110, %v111
    %v113 = vrot.slane %v112, 2
    %v114 = vadd.f32 %v112, %v113
    %v115 = vrot.slane %v114, 1
    %v116 = vadd.f32 %v114, %v115
    %v117 = vsel %vm88, %v26, 0.0
    %v118 = vrot.slane %v117, 4
    %v119 = vadd.f32 %v117, %v118
    %v120 = vrot.slane %v119, 2
    %v121 = vadd.f32 %v119, %v120
    %v122 = vrot.slane %v121, 1
    %v123 = vadd.f32 %v121, %v122
    %v124 = vsel %vm88, %v58, 0.0
    %v125 = vrot.slane %v124, 4
    %v126 = vadd.f32 %v124, %v125
    %v127 = vrot.slane %v126, 2
    %v128 = vadd.f32 %v126, %v127
    %v129 = vrot.slane %v128, 1
    %v130 = vadd.f32 %v128, %v129
    %v131 = vsel %vm88, %v27, 0.0
    %v132 = vrot.slane %v131, 4
    %v133 = vadd.f32 %v131, %v132
    %v134 = vrot.slane %v133, 2
    %v135 = vadd.f32 %v133, %v134
    %v136 = vrot.slane %v135, 1
    %v137 = vadd.f32 %v135, %v136
    %v138 = vsel %vm88, %v59, 0.0
    %v139 = vrot.slane %v138, 4
    %v140 = vadd.f32 %v138, %v139
    %v141 = vrot.slane %v140, 2
    %v142 = vadd.f32 %v140, %v141
    %v143 = vrot.slane %v142, 1
    %v144 = vadd.f32 %v142, %v143
    %v145 = vsel %vm88, %v28, 0.0
    %v146 = vrot.slane %v145, 4
    %v147 = vadd.f32 %v145, %v146
    %v148 = vrot.slane %v147, 2
    %v149 = vadd.f32 %v147, %v148
    %v150 = vrot.slane %v149, 1
    %v151 = vadd.f32 %v149, %v150
    %v152 = vsel %vm88, %v60, 0.0
    %v153 = vrot.slane %v152, 4
    %v154 = vadd.f32 %v152, %v153
    %v155 = vrot.slane %v154, 2
    %v156 = vadd.f32 %v154, %v155
    %v157 = vrot.slane %v156, 1
    %v158 = vadd.f32 %v156, %v157
    %v159 = vsel %vm88, %v29, 0.0
    %v160 = vrot.slane %v159, 4
    %v161 = vadd.f32 %v159, %v160
    %v162 = vrot.slane %v161, 2
    %v163 = vadd.f32 %v161, %v162
    %v164 = vrot.slane %v163, 1
    %v165 = vadd.f32 %v163, %v164
    %v166 = vsel %vm88, %v61, 0.0
    %v167 = vrot.slane %v166, 4
    %v168 = vadd.f32 %v166, %v167
    %v169 = vrot.slane %v168, 2
    %v170 = vadd.f32 %v168, %v169
    %v171 = vrot.slane %v170, 1
    %v172 = vadd.f32 %v170, %v171
    %v173 = vsel %vm88, %v30, 0.0
    %v174 = vrot.slane %v173, 4
    %v175 = vadd.f32 %v173, %v174
    %v176 = vrot.slane %v175, 2
    %v177 = vadd.f32 %v175, %v176
    %v178 = vrot.slane %v177, 1
    %v179 = vadd.f32 %v177, %v178
    %v180 = vsel %vm88, %v62, 0.0
    %v181 = vrot.slane %v180, 4
    %v182 = vadd.f32 %v180, %v181
    %v183 = vrot.slane %v182, 2
    %v184 = vadd.f32 %v182, %v183
    %v185 = vrot.slane %v184, 1
    %v186 = vadd.f32 %v184, %v185
    %v187 = vsel %vm88, %v31, 0.0
    %v188 = vrot.slane %v187, 4
    %v189 = vadd.f32 %v187, %v188
    %v190 = vrot.slane %v189, 2
    %v191 = vadd.f32 %v189, %v190
    %v192 = vrot.slane %v191, 1
    %v193 = vadd.f32 %v191, %v192
    %v194 = vsel %vm88, %v63, 0.0
    %v195 = vrot.slane %v194, 4
    %v196 = vadd.f32 %v194, %v195
    %v197 = vrot.slane %v196, 2
    %v198 = vadd.f32 %v196, %v197
    %v199 = vrot.slane %v198, 1
    %v200 = vadd.f32 %v198, %v199
    %v201 = vsel %vm88, %v32, 0.0
    %v202 = vrot.slane %v201, 4
    %v203 = vadd.f32 %v201, %v202
    %v204 = vrot.slane %v203, 2
    %v205 = vadd.f32 %v203, %v204
    %v206 = vrot.slane %v205, 1
    %v207 = vadd.f32 %v205, %v206
    %v208 = vsel %vm88, %v64, 0.0
    %v209 = vrot.slane %v208, 4
    %v210 = vadd.f32 %v208, %v209
    %v211 = vrot.slane %v210, 2
    %v212 = vadd.f32 %v210, %v211
    %v213 = vrot.slane %v212, 1
    %v214 = vadd.f32 %v212, %v213
    %v215 = vsel %vm88, %v33, 0.0
    %v216 = vrot.slane %v215, 4
    %v217 = vadd.f32 %v215, %v216
    %v218 = vrot.slane %v217, 2
    %v219 = vadd.f32 %v217, %v218
    %v220 = vrot.slane %v219, 1
    %v221 = vadd.f32 %v219, %v220
    %v222 = vsel %vm88, %v65, 0.0
    %v223 = vrot.slane %v222, 4
    %v224 = vadd.f32 %v222, %v223
    %v225 = vrot.slane %v224, 2
    %v226 = vadd.f32 %v224, %v225
    %v227 = vrot.slane %v226, 1
    %v228 = vadd.f32 %v226, %v227
    %v229 = vsel %vm88, %v34, 0.0
    %v230 = vrot.slane %v229, 4
    %v231 = vadd.f32 %v229, %v230
    %v232 = vrot.slane %v231, 2
    %v233 = vadd.f32 %v231, %v232
    %v234 = vrot.slane %v233, 1
    %v235 = vadd.f32 %v233, %v234
    %v236 = vsel %vm88, %v66, 0.0
    %v237 = vrot.slane %v236, 4
    %v238 = vadd.f32 %v236, %v237
    %v239 = vrot.slane %v238, 2
    %v240 = vadd.f32 %v238, %v239
    %v241 = vrot.slane %v240, 1
    %v242 = vadd.f32 %v240, %v241
    %v243 = vsel %vm88, %v35, 0.0
    %v244 = vrot.slane %v243, 4
    %v245 = vadd.f32 %v243, %v244
    %v246 = vrot.slane %v245, 2
    %v247 = vadd.f32 %v245, %v246
    %v248 = vrot.slane %v247, 1
    %v249 = vadd.f32 %v247, %v248
    %v250 = vsel %vm88, %v67, 0.0
    %v251 = vrot.slane %v250, 4
    %v252 = vadd.f32 %v250, %v251
    %v253 = vrot.slane %v252, 2
    %v254 = vadd.f32 %v252, %v253
    %v255 = vrot.slane %v254, 1
    %v256 = vadd.f32 %v254, %v255
    %v257 = vsel %vm88, %v36, 0.0
    %v258 = vrot.slane %v257, 4
    %v259 = vadd.f32 %v257, %v258
    %v260 = vrot.slane %v259, 2
    %v261 = vadd.f32 %v259, %v260
    %v262 = vrot.slane %v261, 1
    %v263 = vadd.f32 %v261, %v262
    %v264 = vsel %vm88, %v68, 0.0
    %v265 = vrot.slane %v264, 4
    %v266 = vadd.f32 %v264, %v265
    %v267 = vrot.slane %v266, 2
    %v268 = vadd.f32 %v266, %v267
    %v269 = vrot.slane %v268, 1
    %v270 = vadd.f32 %v268, %v269
    %v271 = vsel %vm88, %v37, 0.0
    %v272 = vrot.slane %v271, 4
    %v273 = vadd.f32 %v271, %v272
    %v274 = vrot.slane %v273, 2
    %v275 = vadd.f32 %v273, %v274
    %v276 = vrot.slane %v275, 1
    %v277 = vadd.f32 %v275, %v276
    %v278 = vsel %vm88, %v69, 0.0
    %v279 = vrot.slane %v278, 4
    %v280 = vadd.f32 %v278, %v279
    %v281 = vrot.slane %v280, 2
    %v282 = vadd.f32 %v280, %v281
    %v283 = vrot.slane %v282, 1
    %v284 = vadd.f32 %v282, %v283
    %v285 = vsel %vm88, %v38, 0.0
    %v286 = vrot.slane %v285, 4
    %v287 = vadd.f32 %v285, %v286
    %v288 = vrot.slane %v287, 2
    %v289 = vadd.f32 %v287, %v288
    %v290 = vrot.slane %v289, 1
    %v291 = vadd.f32 %v289, %v290
    %v292 = vsel %vm88, %v70, 0.0
    %v293 = vrot.slane %v292, 4
    %v294 = vadd.f32 %v292, %v293
    %v295 = vrot.slane %v294, 2
    %v296 = vadd.f32 %v294, %v295
    %v297 = vrot.slane %v296, 1
    %v298 = vadd.f32 %v296, %v297
    %v299 = vsel %vm88, %v39, 0.0
    %v300 = vrot.slane %v299, 4
    %v301 = vadd.f32 %v299, %v300
    %v302 = vrot.slane %v301, 2
    %v303 = vadd.f32 %v301, %v302
    %v304 = vrot.slane %v303, 1
    %v305 = vadd.f32 %v303, %v304
    %v306 = vsel %vm88, %v71, 0.0
    %v307 = vrot.slane %v306, 4
    %v308 = vadd.f32 %v306, %v307
    %v309 = vrot.slane %v308, 2
    %v310 = vadd.f32 %v308, %v309
    %v311 = vrot.slane %v310, 1
    %v312 = vadd.f32 %v310, %v311
    %345 = vrot.lane.b32.xlu0 %v95, 124
    %v346 = vpop.permute.xlu0 %345
    %347 = vrot.lane.b32.xlu0 %v102, 124
    %v348 = vpop.permute.xlu0 %347
    %349 = vrot.lane.b32.xlu0 %v109, 124
    %v350 = vpop.permute.xlu0 %349
    %351 = vrot.lane.b32.xlu0 %v116, 124
    %v352 = vpop.permute.xlu0 %351
    %353 = vrot.lane.b32.xlu0 %v123, 124
    %v354 = vpop.permute.xlu0 %353
    %355 = vrot.lane.b32.xlu0 %v130, 124
    %v356 = vpop.permute.xlu0 %355
    %357 = vrot.lane.b32.xlu0 %v137, 124
    %v358 = vpop.permute.xlu0 %357
    %359 = vrot.lane.b32.xlu0 %v144, 124
    %v360 = vpop.permute.xlu0 %359
    %361 = vrot.lane.b32.xlu0 %v151, 124
    %v362 = vpop.permute.xlu0 %361
    %363 = vrot.lane.b32.xlu0 %v158, 124
    %v364 = vpop.permute.xlu0 %363
    %365 = vrot.lane.b32.xlu0 %v165, 124
    %v366 = vpop.permute.xlu0 %365
    %367 = vrot.lane.b32.xlu0 %v172, 124
    %v368 = vpop.permute.xlu0 %367
    %369 = vrot.lane.b32.xlu0 %v179, 124
    %v370 = vpop.permute.xlu0 %369
    %371 = vrot.lane.b32.xlu0 %v186, 124
    %v372 = vpop.permute.xlu0 %371
    %373 = vrot.lane.b32.xlu0 %v193, 124
    %v374 = vpop.permute.xlu0 %373
    %375 = vrot.lane.b32.xlu0 %v200, 124
    %v376 = vpop.permute.xlu0 %375
    %377 = vrot.lane.b32.xlu0 %v207, 124
    %v378 = vpop.permute.xlu0 %377
    %379 = vrot.lane.b32.xlu0 %v214, 124
    %v380 = vpop.permute.xlu0 %379
    %381 = vrot.lane.b32.xlu0 %v221, 124
    %v382 = vpop.permute.xlu0 %381
    %383 = vrot.lane.b32.xlu0 %v228, 124
    %v384 = vpop.permute.xlu0 %383
    %385 = vrot.lane.b32.xlu0 %v235, 124
    %v386 = vpop.permute.xlu0 %385
    %387 = vrot.lane.b32.xlu0 %v242, 124
    %v388 = vpop.permute.xlu0 %387
    %389 = vrot.lane.b32.xlu0 %v249, 124
    %v390 = vpop.permute.xlu0 %389
    %391 = vrot.lane.b32.xlu0 %v256, 124
    %v392 = vpop.permute.xlu0 %391
    %393 = vrot.lane.b32.xlu0 %v263, 124
    %v394 = vpop.permute.xlu0 %393
    %395 = vrot.lane.b32.xlu0 %v270, 124
    %v396 = vpop.permute.xlu0 %395
    %397 = vrot.lane.b32.xlu0 %v277, 124
    %v398 = vpop.permute.xlu0 %397
    %399 = vrot.lane.b32.xlu0 %v284, 124
    %v400 = vpop.permute.xlu0 %399
    %401 = vrot.lane.b32.xlu0 %v291, 124
    %v402 = vpop.permute.xlu0 %401
    %403 = vrot.lane.b32.xlu0 %v298, 124
    %v404 = vpop.permute.xlu0 %403
    %405 = vrot.lane.b32.xlu0 %v305, 124
    %v406 = vpop.permute.xlu0 %405
    %407 = vrot.lane.b32.xlu0 %v312, 124
    %v408 = vpop.permute.xlu0 %407
    %409 = vrot.lane.b32.xlu0 %v95, 120
    %v410 = vpop.permute.xlu0 %409
    %411 = vrot.lane.b32.xlu0 %v102, 120
    %v412 = vpop.permute.xlu0 %411
    %413 = vrot.lane.b32.xlu0 %v109, 120
    %v414 = vpop.permute.xlu0 %413
    %415 = vrot.lane.b32.xlu0 %v116, 120
    %v416 = vpop.permute.xlu0 %415
    %417 = vrot.lane.b32.xlu0 %v123, 120
    %v418 = vpop.permute.xlu0 %417
    %419 = vrot.lane.b32.xlu0 %v130, 120
    %v420 = vpop.permute.xlu0 %419
    %421 = vrot.lane.b32.xlu0 %v137, 120
    %v422 = vpop.permute.xlu0 %421
    %423 = vrot.lane.b32.xlu0 %v144, 120
    %v424 = vpop.permute.xlu0 %423
    %425 = vrot.lane.b32.xlu0 %v151, 120
    %v426 = vpop.permute.xlu0 %425
    %427 = vrot.lane.b32.xlu0 %v158, 120
    %v428 = vpop.permute.xlu0 %427
    %429 = vrot.lane.b32.xlu0 %v165, 120
    %v430 = vpop.permute.xlu0 %429
    %431 = vrot.lane.b32.xlu0 %v172, 120
    %v432 = vpop.permute.xlu0 %431
    %433 = vrot.lane.b32.xlu0 %v179, 120
    %v434 = vpop.permute.xlu0 %433
    %435 = vrot.lane.b32.xlu0 %v186, 120
    %v436 = vpop.permute.xlu0 %435
    %437 = vrot.lane.b32.xlu0 %v193, 120
    %v438 = vpop.permute.xlu0 %437
    %439 = vrot.lane.b32.xlu0 %v200, 120
    %v440 = vpop.permute.xlu0 %439
    %441 = vrot.lane.b32.xlu0 %v207, 120
    %v442 = vpop.permute.xlu0 %441
    %443 = vrot.lane.b32.xlu0 %v214, 120
    %v444 = vpop.permute.xlu0 %443
    %445 = vrot.lane.b32.xlu0 %v221, 120
    %v446 = vpop.permute.xlu0 %445
    %447 = vrot.lane.b32.xlu0 %v228, 120
    %v448 = vpop.permute.xlu0 %447
    %449 = vrot.lane.b32.xlu0 %v235, 120
    %v450 = vpop.permute.xlu0 %449
    %451 = vrot.lane.b32.xlu0 %v242, 120
    %v452 = vpop.permute.xlu0 %451
    %453 = vrot.lane.b32.xlu0 %v249, 120
    %v454 = vpop.permute.xlu0 %453
    %455 = vrot.lane.b32.xlu0 %v256, 120
    %v456 = vpop.permute.xlu0 %455
    %457 = vrot.lane.b32.xlu0 %v263, 120
    %v458 = vpop.permute.xlu0 %457
    %459 = vrot.lane.b32.xlu0 %v270, 120
    %v460 = vpop.permute.xlu0 %459
    %461 = vrot.lane.b32.xlu0 %v277, 120
    %v462 = vpop.permute.xlu0 %461
    %463 = vrot.lane.b32.xlu0 %v284, 120
    %v464 = vpop.permute.xlu0 %463
    %465 = vrot.lane.b32.xlu0 %v291, 120
    %v466 = vpop.permute.xlu0 %465
    %467 = vrot.lane.b32.xlu0 %v298, 120
    %v468 = vpop.permute.xlu0 %467
    %469 = vrot.lane.b32.xlu0 %v305, 120
    %v470 = vpop.permute.xlu0 %469
    %471 = vrot.lane.b32.xlu0 %v312, 120
    %v472 = vpop.permute.xlu0 %471
    %473 = vrot.lane.b32.xlu0 %v95, 116
    %v474 = vpop.permute.xlu0 %473
    %475 = vrot.lane.b32.xlu0 %v102, 116
    %v476 = vpop.permute.xlu0 %475
    %477 = vrot.lane.b32.xlu0 %v109, 116
    %v478 = vpop.permute.xlu0 %477
    %479 = vrot.lane.b32.xlu0 %v116, 116
    %v480 = vpop.permute.xlu0 %479
    %481 = vrot.lane.b32.xlu0 %v123, 116
    %v482 = vpop.permute.xlu0 %481
    %483 = vrot.lane.b32.xlu0 %v130, 116
    %v484 = vpop.permute.xlu0 %483
    %485 = vrot.lane.b32.xlu0 %v137, 116
    %v486 = vpop.permute.xlu0 %485
    %487 = vrot.lane.b32.xlu0 %v144, 116
    %v488 = vpop.permute.xlu0 %487
    %489 = vrot.lane.b32.xlu0 %v151, 116
    %v490 = vpop.permute.xlu0 %489
    %491 = vrot.lane.b32.xlu0 %v158, 116
    %v492 = vpop.permute.xlu0 %491
    %493 = vrot.lane.b32.xlu0 %v165, 116
    %v494 = vpop.permute.xlu0 %493
    %495 = vrot.lane.b32.xlu0 %v172, 116
    %v496 = vpop.permute.xlu0 %495
    %497 = vrot.lane.b32.xlu0 %v179, 116
    %v498 = vpop.permute.xlu0 %497
    %499 = vrot.lane.b32.xlu0 %v186, 116
    %v500 = vpop.permute.xlu0 %499
    %501 = vrot.lane.b32.xlu0 %v193, 116
    %v502 = vpop.permute.xlu0 %501
    %503 = vrot.lane.b32.xlu0 %v200, 116
    %v504 = vpop.permute.xlu0 %503
    %505 = vrot.lane.b32.xlu0 %v207, 116
    %v506 = vpop.permute.xlu0 %505
    %507 = vrot.lane.b32.xlu0 %v214, 116
    %v508 = vpop.permute.xlu0 %507
    %509 = vrot.lane.b32.xlu0 %v221, 116
    %v510 = vpop.permute.xlu0 %509
    %511 = vrot.lane.b32.xlu0 %v228, 116
    %v512 = vpop.permute.xlu0 %511
    %513 = vrot.lane.b32.xlu0 %v235, 116
    %v514 = vpop.permute.xlu0 %513
    %515 = vrot.lane.b32.xlu0 %v242, 116
    %v516 = vpop.permute.xlu0 %515
    %517 = vrot.lane.b32.xlu0 %v249, 116
    %v518 = vpop.permute.xlu0 %517
    %519 = vrot.lane.b32.xlu0 %v256, 116
    %v520 = vpop.permute.xlu0 %519
    %521 = vrot.lane.b32.xlu0 %v263, 116
    %v522 = vpop.permute.xlu0 %521
    %523 = vrot.lane.b32.xlu0 %v270, 116
    %v524 = vpop.permute.xlu0 %523
    %525 = vrot.lane.b32.xlu0 %v277, 116
    %v526 = vpop.permute.xlu0 %525
    %527 = vrot.lane.b32.xlu0 %v284, 116
    %v528 = vpop.permute.xlu0 %527
    %529 = vrot.lane.b32.xlu0 %v291, 116
    %v530 = vpop.permute.xlu0 %529
    %531 = vrot.lane.b32.xlu0 %v298, 116
    %v532 = vpop.permute.xlu0 %531
    %533 = vrot.lane.b32.xlu0 %v305, 116
    %v534 = vpop.permute.xlu0 %533
    %535 = vrot.lane.b32.xlu0 %v312, 116
    %v536 = vpop.permute.xlu0 %535
    %v537 = vrot.slane %v102, 7
    %vm538 = vcmask 1041409
    %v539 = vsel %vm538, %v537, %v95
    %v540 = vrot.slane %v109, 6
    %vm541 = vcmask 1042434
    %v542 = vsel %vm541, %v540, %v539
    %v543 = vrot.slane %v116, 5
    %vm544 = vcmask 1043459
    %v545 = vsel %vm544, %v543, %v542
    %v546 = vrot.slane %v348, 7
    %v547 = vsel %vm538, %v546, %v346
    %v548 = vrot.slane %v350, 6
    %v549 = vsel %vm541, %v548, %v547
    %v550 = vrot.slane %v352, 5
    %v551 = vsel %vm544, %v550, %v549
    %v552 = vrot.slane %v412, 7
    %v553 = vsel %vm538, %v552, %v410
    %v554 = vrot.slane %v414, 6
    %v555 = vsel %vm541, %v554, %v553
    %v556 = vrot.slane %v416, 5
    %v557 = vsel %vm544, %v556, %v555
    %v558 = vrot.slane %v476, 7
    %v559 = vsel %vm538, %v558, %v474
    %v560 = vrot.slane %v478, 6
    %v561 = vsel %vm541, %v560, %v559
    %v562 = vrot.slane %v480, 5
    %v563 = vsel %vm544, %v562, %v561
    %v564 = vrot.slane %v214, 7
    %v565 = vsel %vm538, %v564, %v207
    %v566 = vrot.slane %v221, 6
    %v567 = vsel %vm541, %v566, %v565
    %v568 = vrot.slane %v228, 5
    %v569 = vsel %vm544, %v568, %v567
    %v570 = vrot.slane %v380, 7
    %v571 = vsel %vm538, %v570, %v378
    %v572 = vrot.slane %v382, 6
    %v573 = vsel %vm541, %v572, %v571
    %v574 = vrot.slane %v384, 5
    %v575 = vsel %vm544, %v574, %v573
    %v576 = vrot.slane %v444, 7
    %v577 = vsel %vm538, %v576, %v442
    %v578 = vrot.slane %v446, 6
    %v579 = vsel %vm541, %v578, %v577
    %v580 = vrot.slane %v448, 5
    %v581 = vsel %vm544, %v580, %v579
    %v582 = vrot.slane %v508, 7
    %v583 = vsel %vm538, %v582, %v506
    %v584 = vrot.slane %v510, 6
    %v585 = vsel %vm541, %v584, %v583
    %v586 = vrot.slane %v512, 5
    %v587 = vsel %vm544, %v586, %v585
    %v588 = vrot.slane %v130, 7
    %v589 = vsel %vm538, %v588, %v123
    %v590 = vrot.slane %v137, 6
    %v591 = vsel %vm541, %v590, %v589
    %v592 = vrot.slane %v144, 5
    %v593 = vsel %vm544, %v592, %v591
    %v594 = vrot.slane %v356, 7
    %v595 = vsel %vm538, %v594, %v354
    %v596 = vrot.slane %v358, 6
    %v597 = vsel %vm541, %v596, %v595
    %v598 = vrot.slane %v360, 5
    %v599 = vsel %vm544, %v598, %v597
    %v600 = vrot.slane %v420, 7
    %v601 = vsel %vm538, %v600, %v418
    %v602 = vrot.slane %v422, 6
    %v603 = vsel %vm541, %v602, %v601
    %v604 = vrot.slane %v424, 5
    %v605 = vsel %vm544, %v604, %v603
    %v606 = vrot.slane %v484, 7
    %v607 = vsel %vm538, %v606, %v482
    %v608 = vrot.slane %v486, 6
    %v609 = vsel %vm541, %v608, %v607
    %v610 = vrot.slane %v488, 5
    %v611 = vsel %vm544, %v610, %v609
    %v612 = vrot.slane %v242, 7
    %v613 = vsel %vm538, %v612, %v235
    %v614 = vrot.slane %v249, 6
    %v615 = vsel %vm541, %v614, %v613
    %v616 = vrot.slane %v256, 5
    %v617 = vsel %vm544, %v616, %v615
    %v618 = vrot.slane %v388, 7
    %v619 = vsel %vm538, %v618, %v386
    %v620 = vrot.slane %v390, 6
    %v621 = vsel %vm541, %v620, %v619
    %v622 = vrot.slane %v392, 5
    %v623 = vsel %vm544, %v622, %v621
    %v624 = vrot.slane %v452, 7
    %v625 = vsel %vm538, %v624, %v450
    %v626 = vrot.slane %v454, 6
    %v627 = vsel %vm541, %v626, %v625
    %v628 = vrot.slane %v456, 5
    %v629 = vsel %vm544, %v628, %v627
    %v630 = vrot.slane %v516, 7
    %v631 = vsel %vm538, %v630, %v514
    %v632 = vrot.slane %v518, 6
    %v633 = vsel %vm541, %v632, %v631
    %v634 = vrot.slane %v520, 5
    %v635 = vsel %vm544, %v634, %v633
    %v636 = vrot.slane %v158, 7
    %v637 = vsel %vm538, %v636, %v151
    %v638 = vrot.slane %v165, 6
    %v639 = vsel %vm541, %v638, %v637
    %v640 = vrot.slane %v172, 5
    %v641 = vsel %vm544, %v640, %v639
    %v642 = vrot.slane %v364, 7
    %v643 = vsel %vm538, %v642, %v362
    %v644 = vrot.slane %v366, 6
    %v645 = vsel %vm541, %v644, %v643
    %v646 = vrot.slane %v368, 5
    %v647 = vsel %vm544, %v646, %v645
    %v648 = vrot.slane %v428, 7
    %v649 = vsel %vm538, %v648, %v426
    %v650 = vrot.slane %v430, 6
    %v651 = vsel %vm541, %v650, %v649
    %v652 = vrot.slane %v432, 5
    %v653 = vsel %vm544, %v652, %v651
    %v654 = vrot.slane %v492, 7
    %v655 = vsel %vm538, %v654, %v490
    %v656 = vrot.slane %v494, 6
    %v657 = vsel %vm541, %v656, %v655
    %v658 = vrot.slane %v496, 5
    %v659 = vsel %vm544, %v658, %v657
    %v660 = vrot.slane %v270, 7
    %v661 = vsel %vm538, %v660, %v263
    %v662 = vrot.slane %v277, 6
    %v663 = vsel %vm541, %v662, %v661
    %v664 = vrot.slane %v284, 5
    %v665 = vsel %vm544, %v664, %v663
    %v666 = vrot.slane %v396, 7
    %v667 = vsel %vm538, %v666, %v394
    %v668 = vrot.slane %v398, 6
    %v669 = vsel %vm541, %v668, %v667
    %v670 = vrot.slane %v400, 5
    %v671 = vsel %vm544, %v670, %v669
    %v672 = vrot.slane %v460, 7
    %v673 = vsel %vm538, %v672, %v458
    %v674 = vrot.slane %v462, 6
    %v675 = vsel %vm541, %v674, %v673
    %v676 = vrot.slane %v464, 5
    %v677 = vsel %vm544, %v676, %v675
    %v678 = vrot.slane %v524, 7
    %v679 = vsel %vm538, %v678, %v522
    %v680 = vrot.slane %v526, 6
    %v681 = vsel %vm541, %v680, %v679
    %v682 = vrot.slane %v528, 5
    %v683 = vsel %vm544, %v682, %v681
    %v684 = vrot.slane %v186, 7
    %v685 = vsel %vm538, %v684, %v179
    %v686 = vrot.slane %v193, 6
    %v687 = vsel %vm541, %v686, %v685
    %v688 = vrot.slane %v200, 5
    %v689 = vsel %vm544, %v688, %v687
    %v690 = vrot.slane %v372, 7
    %v691 = vsel %vm538, %v690, %v370
    %v692 = vrot.slane %v374, 6
    %v693 = vsel %vm541, %v692, %v691
    %v694 = vrot.slane %v376, 5
    %v695 = vsel %vm544, %v694, %v693
    %v696 = vrot.slane %v436, 7
    %v697 = vsel %vm538, %v696, %v434
    %v698 = vrot.slane %v438, 6
    %v699 = vsel %vm541, %v698, %v697
    %v700 = vrot.slane %v440, 5
    %v701 = vsel %vm544, %v700, %v699
    %v702 = vrot.slane %v500, 7
    %v703 = vsel %vm538, %v702, %v498
    %v704 = vrot.slane %v502, 6
    %v705 = vsel %vm541, %v704, %v703
    %v706 = vrot.slane %v504, 5
    %v707 = vsel %vm544, %v706, %v705
    %v708 = vrot.slane %v298, 7
    %v709 = vsel %vm538, %v708, %v291
    %v710 = vrot.slane %v305, 6
    %v711 = vsel %vm541, %v710, %v709
    %v712 = vrot.slane %v312, 5
    %v713 = vsel %vm544, %v712, %v711
    %v714 = vrot.slane %v404, 7
    %v715 = vsel %vm538, %v714, %v402
    %v716 = vrot.slane %v406, 6
    %v717 = vsel %vm541, %v716, %v715
    %v718 = vrot.slane %v408, 5
    %v719 = vsel %vm544, %v718, %v717
    %v720 = vrot.slane %v468, 7
    %v721 = vsel %vm538, %v720, %v466
    %v722 = vrot.slane %v470, 6
    %v723 = vsel %vm541, %v722, %v721
    %v724 = vrot.slane %v472, 5
    %v725 = vsel %vm544, %v724, %v723
    %v726 = vrot.slane %v532, 7
    %v727 = vsel %vm538, %v726, %v530
    %v728 = vrot.slane %v534, 6
    %v729 = vsel %vm541, %v728, %v727
    %v730 = vrot.slane %v536, 5
    %v731 = vsel %vm544, %v730, %v729
    %v764 = vrot.slane %v557, 4
    %vm765 = vcmask 1047556
    %v766 = vsel %vm765, %v764, %v545
    %v768 = vunpack.c.l.s4 1983009808
    %v769 = vunpack.c.0.s8 %v768
    %v770 = vperm.slane %v766, %v769
    %v771 = vrot.slane %v563, 4
    %v772 = vsel %vm765, %v771, %v551
    %v774 = vunpack.c.l.s4 1983009808
    %v775 = vunpack.c.0.s8 %v774
    %v776 = vperm.slane %v772, %v775
    %v777 = vrot.slane %v776, 4
    %v778 = vsel %vm765, %v777, %v770
    %v779 = vrot.slane %v770, 4
    %v780 = vsel %vm765, %v776, %v779
    %v782 = vunpack.c.l.s4 1934713408
    %v783 = vunpack.c.0.s8 %v782
    %v784 = vperm.slane %v778, %v783
    %v786 = vunpack.c.l.s4 1934713408
    %v787 = vunpack.c.0.s8 %v786
    %v788 = vperm.slane %v780, %v787
    %v789 = vrot.slane %v784, 4
    %v790 = vsel %vm765, 0.0, %v789
    %v791 = vrot.slane %v788, 4
    %v792 = vsel %vm765, 0.0, %v791
    %v793 = vrot.slane %v581, 4
    %v794 = vsel %vm765, %v793, %v569
    %v796 = vunpack.c.l.s4 1983009808
    %v797 = vunpack.c.0.s8 %v796
    %v798 = vperm.slane %v794, %v797
    %v799 = vrot.slane %v587, 4
    %v800 = vsel %vm765, %v799, %v575
    %v802 = vunpack.c.l.s4 1983009808
    %v803 = vunpack.c.0.s8 %v802
    %v804 = vperm.slane %v800, %v803
    %v805 = vrot.slane %v804, 4
    %v806 = vsel %vm765, %v805, %v798
    %v807 = vrot.slane %v798, 4
    %v808 = vsel %vm765, %v804, %v807
    %v810 = vunpack.c.l.s4 1934713408
    %v811 = vunpack.c.0.s8 %v810
    %v812 = vperm.slane %v806, %v811
    %v814 = vunpack.c.l.s4 1934713408
    %v815 = vunpack.c.0.s8 %v814
    %v816 = vperm.slane %v808, %v815
    %v817 = vrot.slane %v812, 4
    %v818 = vsel %vm765, 0.0, %v817
    %v819 = vrot.slane %v816, 4
    %v820 = vsel %vm765, 0.0, %v819
    %v821 = vrot.slane %v605, 4
    %v822 = vsel %vm765, %v821, %v593
    %v824 = vunpack.c.l.s4 1983009808
    %v825 = vunpack.c.0.s8 %v824
    %v826 = vperm.slane %v822, %v825
    %v827 = vrot.slane %v611, 4
    %v828 = vsel %vm765, %v827, %v599
    %v830 = vunpack.c.l.s4 1983009808
    %v831 = vunpack.c.0.s8 %v830
    %v832 = vperm.slane %v828, %v831
    %v833 = vrot.slane %v832, 4
    %v834 = vsel %vm765, %v833, %v826
    %v835 = vrot.slane %v826, 4
    %v836 = vsel %vm765, %v832, %v835
    %v838 = vunpack.c.l.s4 1934713408
    %v839 = vunpack.c.0.s8 %v838
    %v840 = vperm.slane %v834, %v839
    %v842 = vunpack.c.l.s4 1934713408
    %v843 = vunpack.c.0.s8 %v842
    %v844 = vperm.slane %v836, %v843
    %v845 = vrot.slane %v840, 4
    %v846 = vsel %vm765, 0.0, %v845
    %v847 = vrot.slane %v844, 4
    %v848 = vsel %vm765, 0.0, %v847
    %v849 = vrot.slane %v629, 4
    %v850 = vsel %vm765, %v849, %v617
    %v852 = vunpack.c.l.s4 1983009808
    %v853 = vunpack.c.0.s8 %v852
    %v854 = vperm.slane %v850, %v853
    %v855 = vrot.slane %v635, 4
    %v856 = vsel %vm765, %v855, %v623
    %v858 = vunpack.c.l.s4 1983009808
    %v859 = vunpack.c.0.s8 %v858
    %v860 = vperm.slane %v856, %v859
    %v861 = vrot.slane %v860, 4
    %v862 = vsel %vm765, %v861, %v854
    %v863 = vrot.slane %v854, 4
    %v864 = vsel %vm765, %v860, %v863
    %v866 = vunpack.c.l.s4 1934713408
    %v867 = vunpack.c.0.s8 %v866
    %v868 = vperm.slane %v862, %v867
    %v870 = vunpack.c.l.s4 1934713408
    %v871 = vunpack.c.0.s8 %v870
    %v872 = vperm.slane %v864, %v871
    %v873 = vrot.slane %v868, 4
    %v874 = vsel %vm765, 0.0, %v873
    %v875 = vrot.slane %v872, 4
    %v876 = vsel %vm765, 0.0, %v875
    %v877 = vrot.slane %v653, 4
    %v878 = vsel %vm765, %v877, %v641
    %v880 = vunpack.c.l.s4 1983009808
    %v881 = vunpack.c.0.s8 %v880
    %v882 = vperm.slane %v878, %v881
    %v883 = vrot.slane %v659, 4
    %v884 = vsel %vm765, %v883, %v647
    %v886 = vunpack.c.l.s4 1983009808
    %v887 = vunpack.c.0.s8 %v886
    %v888 = vperm.slane %v884, %v887
    %v889 = vrot.slane %v888, 4
    %v890 = vsel %vm765, %v889, %v882
    %v891 = vrot.slane %v882, 4
    %v892 = vsel %vm765, %v888, %v891
    %v894 = vunpack.c.l.s4 1934713408
    %v895 = vunpack.c.0.s8 %v894
    %v896 = vperm.slane %v890, %v895
    %v898 = vunpack.c.l.s4 1934713408
    %v899 = vunpack.c.0.s8 %v898
    %v900 = vperm.slane %v892, %v899
    %v901 = vrot.slane %v896, 4
    %v902 = vsel %vm765, 0.0, %v901
    %v903 = vrot.slane %v900, 4
    %v904 = vsel %vm765, 0.0, %v903
    %v905 = vrot.slane %v677, 4
    %v906 = vsel %vm765, %v905, %v665
    %v908 = vunpack.c.l.s4 1983009808
    %v909 = vunpack.c.0.s8 %v908
    %v910 = vperm.slane %v906, %v909
    %v911 = vrot.slane %v683, 4
    %v912 = vsel %vm765, %v911, %v671
    %v914 = vunpack.c.l.s4 1983009808
    %v915 = vunpack.c.0.s8 %v914
    %v916 = vperm.slane %v912, %v915
    %v917 = vrot.slane %v916, 4
    %v918 = vsel %vm765, %v917, %v910
    %v919 = vrot.slane %v910, 4
    %v920 = vsel %vm765, %v916, %v919
    %v922 = vunpack.c.l.s4 1934713408
    %v923 = vunpack.c.0.s8 %v922
    %v924 = vperm.slane %v918, %v923
    %v926 = vunpack.c.l.s4 1934713408
    %v927 = vunpack.c.0.s8 %v926
    %v928 = vperm.slane %v920, %v927
    %v929 = vrot.slane %v924, 4
    %v930 = vsel %vm765, 0.0, %v929
    %v931 = vrot.slane %v928, 4
    %v932 = vsel %vm765, 0.0, %v931
    %v933 = vrot.slane %v701, 4
    %v934 = vsel %vm765, %v933, %v689
    %v936 = vunpack.c.l.s4 1983009808
    %v937 = vunpack.c.0.s8 %v936
    %v938 = vperm.slane %v934, %v937
    %v939 = vrot.slane %v707, 4
    %v940 = vsel %vm765, %v939, %v695
    %v942 = vunpack.c.l.s4 1983009808
    %v943 = vunpack.c.0.s8 %v942
    %v944 = vperm.slane %v940, %v943
    %v945 = vrot.slane %v944, 4
    %v946 = vsel %vm765, %v945, %v938
    %v947 = vrot.slane %v938, 4
    %v948 = vsel %vm765, %v944, %v947
    %v950 = vunpack.c.l.s4 1934713408
    %v951 = vunpack.c.0.s8 %v950
    %v952 = vperm.slane %v946, %v951
    %v954 = vunpack.c.l.s4 1934713408
    %v955 = vunpack.c.0.s8 %v954
    %v956 = vperm.slane %v948, %v955
    %v957 = vrot.slane %v952, 4
    %v958 = vsel %vm765, 0.0, %v957
    %v959 = vrot.slane %v956, 4
    %v960 = vsel %vm765, 0.0, %v959
    %v961 = vrot.slane %v725, 4
    %v962 = vsel %vm765, %v961, %v713
    %v964 = vunpack.c.l.s4 1983009808
    %v965 = vunpack.c.0.s8 %v964
    %v966 = vperm.slane %v962, %v965
    %v967 = vrot.slane %v731, 4
    %v968 = vsel %vm765, %v967, %v719
    %v970 = vunpack.c.l.s4 1983009808
    %v971 = vunpack.c.0.s8 %v970
    %v972 = vperm.slane %v968, %v971
    %v973 = vrot.slane %v972, 4
    %v974 = vsel %vm765, %v973, %v966
    %v975 = vrot.slane %v966, 4
    %v976 = vsel %vm765, %v972, %v975
    %v978 = vunpack.c.l.s4 1934713408
    %v979 = vunpack.c.0.s8 %v978
    %v980 = vperm.slane %v974, %v979
    %v982 = vunpack.c.l.s4 1934713408
    %v983 = vunpack.c.0.s8 %v982
    %v984 = vperm.slane %v976, %v983
    %v985 = vrot.slane %v980, 4
    %v986 = vsel %vm765, 0.0, %v985
    %v987 = vrot.slane %v984, 4
    %v988 = vsel %vm765, 0.0, %v987
    %vm989 = vcmask 27648
    %v990 = vsel %vm989, %v784, 0.0
    %991 = vadd.xlane.f32.xlu0 %v990
    %v992 = vpop.xlane.xlu0 %991
    %v993 = vsel %vm989, %v790, 0.0
    %994 = vadd.xlane.f32.xlu0 %v993
    %v995 = vpop.xlane.xlu0 %994
    %v996 = vsel %vm989, %v788, 0.0
    %997 = vadd.xlane.f32.xlu0 %v996
    %v998 = vpop.xlane.xlu0 %997
    %v999 = vsel %vm989, %v792, 0.0
    %1000 = vadd.xlane.f32.xlu0 %v999
    %v1001 = vpop.xlane.xlu0 %1000
    %v1002 = vsel %vm989, %v840, 0.0
    %1003 = vadd.xlane.f32.xlu0 %v1002
    %v1004 = vpop.xlane.xlu0 %1003
    %v1005 = vsel %vm989, %v846, 0.0
    %1006 = vadd.xlane.f32.xlu0 %v1005
    %v1007 = vpop.xlane.xlu0 %1006
    %v1008 = vsel %vm989, %v844, 0.0
    %1009 = vadd.xlane.f32.xlu0 %v1008
    %v1010 = vpop.xlane.xlu0 %1009
    %v1011 = vsel %vm989, %v848, 0.0
    %1012 = vadd.xlane.f32.xlu0 %v1011
    %v1013 = vpop.xlane.xlu0 %1012
    %v1014 = vsel %vm989, %v896, 0.0
    %1015 = vadd.xlane.f32.xlu0 %v1014
    %v1016 = vpop.xlane.xlu0 %1015
    %v1017 = vsel %vm989, %v902, 0.0
    %1018 = vadd.xlane.f32.xlu0 %v1017
    %v1019 = vpop.xlane.xlu0 %1018
    %v1020 = vsel %vm989, %v900, 0.0
    %1021 = vadd.xlane.f32.xlu0 %v1020
    %v1022 = vpop.xlane.xlu0 %1021
    %v1023 = vsel %vm989, %v904, 0.0
    %1024 = vadd.xlane.f32.xlu0 %v1023
    %v1025 = vpop.xlane.xlu0 %1024
    %v1026 = vsel %vm989, %v952, 0.0
    %1027 = vadd.xlane.f32.xlu0 %v1026
    %v1028 = vpop.xlane.xlu0 %1027
    %v1029 = vsel %vm989, %v958, 0.0
    %1030 = vadd.xlane.f32.xlu0 %v1029
    %v1031 = vpop.xlane.xlu0 %1030
    %v1032 = vsel %vm989, %v956, 0.0
    %1033 = vadd.xlane.f32.xlu0 %v1032
    %v1034 = vpop.xlane.xlu0 %1033
    %v1035 = vsel %vm989, %v960, 0.0
    %1036 = vadd.xlane.f32.xlu0 %v1035
    %v1037 = vpop.xlane.xlu0 %1036
    %v1038 = vsel %vm989, %v812, 0.0
    %1039 = vadd.xlane.f32.xlu0 %v1038
    %v1040 = vpop.xlane.xlu0 %1039
    %v1041 = vsel %vm989, %v818, 0.0
    %1042 = vadd.xlane.f32.xlu0 %v1041
    %v1043 = vpop.xlane.xlu0 %1042
    %v1044 = vsel %vm989, %v816, 0.0
    %1045 = vadd.xlane.f32.xlu0 %v1044
    %v1046 = vpop.xlane.xlu0 %1045
    %v1047 = vsel %vm989, %v820, 0.0
    %1048 = vadd.xlane.f32.xlu0 %v1047
    %v1049 = vpop.xlane.xlu0 %1048
    %v1050 = vsel %vm989, %v868, 0.0
    %1051 = vadd.xlane.f32.xlu0 %v1050
    %v1052 = vpop.xlane.xlu0 %1051
    %v1053 = vsel %vm989, %v874, 0.0
    %1054 = vadd.xlane.f32.xlu0 %v1053
    %v1055 = vpop.xlane.xlu0 %1054
    %v1056 = vsel %vm989, %v872, 0.0
    %1057 = vadd.xlane.f32.xlu0 %v1056
    %v1058 = vpop.xlane.xlu0 %1057
    %v1059 = vsel %vm989, %v876, 0.0
    %1060 = vadd.xlane.f32.xlu0 %v1059
    %v1061 = vpop.xlane.xlu0 %1060
    %v1062 = vsel %vm989, %v924, 0.0
    %1063 = vadd.xlane.f32.xlu0 %v1062
    %v1064 = vpop.xlane.xlu0 %1063
    %v1065 = vsel %vm989, %v930, 0.0
    %1066 = vadd.xlane.f32.xlu0 %v1065
    %v1067 = vpop.xlane.xlu0 %1066
    %v1068 = vsel %vm989, %v928, 0.0
    %1069 = vadd.xlane.f32.xlu0 %v1068
    %v1070 = vpop.xlane.xlu0 %1069
    %v1071 = vsel %vm989, %v932, 0.0
    %1072 = vadd.xlane.f32.xlu0 %v1071
    %v1073 = vpop.xlane.xlu0 %1072
    %v1074 = vsel %vm989, %v980, 0.0
    %1075 = vadd.xlane.f32.xlu0 %v1074
    %v1076 = vpop.xlane.xlu0 %1075
    %v1077 = vsel %vm989, %v986, 0.0
    %1078 = vadd.xlane.f32.xlu0 %v1077
    %v1079 = vpop.xlane.xlu0 %1078
    %v1080 = vsel %vm989, %v984, 0.0
    %1081 = vadd.xlane.f32.xlu0 %v1080
    %v1082 = vpop.xlane.xlu0 %1081
    %v1083 = vsel %vm989, %v988, 0.0
    %1084 = vadd.xlane.f32.xlu0 %v1083
    %v1085 = vpop.xlane.xlu0 %1084
    %v1086 = vmul.f32 %v992, 0.0625
    %v1087 = vmul.f32 %v995, 0.0625
    %v1088 = vmul.f32 %v998, 0.0625
    %v1089 = vmul.f32 %v1001, 0.0625
    %v1090 = vmul.f32 %v1004, 0.0625
    %v1091 = vmul.f32 %v1007, 0.0625
    %v1092 = vmul.f32 %v1010, 0.0625
    %v1093 = vmul.f32 %v1013, 0.0625
    %v1094 = vmul.f32 %v1016, 0.0625
    %v1095 = vmul.f32 %v1019, 0.0625
    %v1096 = vmul.f32 %v1022, 0.0625
    %v1097 = vmul.f32 %v1025, 0.0625
    %v1098 = vmul.f32 %v1028, 0.0625
    %v1099 = vmul.f32 %v1031, 0.0625
    %v1100 = vmul.f32 %v1034, 0.0625
    %v1101 = vmul.f32 %v1037, 0.0625
    %v1102 = vmul.f32 %v1040, 0.0625
    %v1103 = vmul.f32 %v1043, 0.0625
    %v1104 = vmul.f32 %v1046, 0.0625
    %v1105 = vmul.f32 %v1049, 0.0625
    %v1106 = vmul.f32 %v1052, 0.0625
    %v1107 = vmul.f32 %v1055, 0.0625
    %v1108 = vmul.f32 %v1058, 0.0625
    %v1109 = vmul.f32 %v1061, 0.0625
    %v1110 = vmul.f32 %v1064, 0.0625
    %v1111 = vmul.f32 %v1067, 0.0625
    %v1112 = vmul.f32 %v1070, 0.0625
    %v1113 = vmul.f32 %v1073, 0.0625
    %v1114 = vmul.f32 %v1076, 0.0625
    %v1115 = vmul.f32 %v1079, 0.0625
    %v1116 = vmul.f32 %v1082, 0.0625
    %v1117 = vmul.f32 %v1085, 0.0625
    %v1150 = vlaneseq
    %v1151 = vand.u32 %v1150, 127
    %v1152 = vperm.slane %v1086, %v1151
    %v1153 = vperm.slane %v1087, %v1151
    %v1154 = vperm.slane %v1088, %v1151
    %v1155 = vperm.slane %v1089, %v1151
    %v1156 = vperm.slane %v1090, %v1151
    %v1157 = vperm.slane %v1091, %v1151
    %v1158 = vperm.slane %v1092, %v1151
    %v1159 = vperm.slane %v1093, %v1151
    %v1160 = vperm.slane %v1094, %v1151
    %v1161 = vperm.slane %v1095, %v1151
    %v1162 = vperm.slane %v1096, %v1151
    %v1163 = vperm.slane %v1097, %v1151
    %v1164 = vperm.slane %v1098, %v1151
    %v1165 = vperm.slane %v1099, %v1151
    %v1166 = vperm.slane %v1100, %v1151
    %v1167 = vperm.slane %v1101, %v1151
    %v1168 = vperm.slane %v1102, %v1151
    %v1169 = vperm.slane %v1103, %v1151
    %v1170 = vperm.slane %v1104, %v1151
    %v1171 = vperm.slane %v1105, %v1151
    %v1172 = vperm.slane %v1106, %v1151
    %v1173 = vperm.slane %v1107, %v1151
    %v1174 = vperm.slane %v1108, %v1151
    %v1175 = vperm.slane %v1109, %v1151
    %v1176 = vperm.slane %v1110, %v1151
    %v1177 = vperm.slane %v1111, %v1151
    %v1178 = vperm.slane %v1112, %v1151
    %v1179 = vperm.slane %v1113, %v1151
    %v1180 = vperm.slane %v1114, %v1151
    %v1181 = vperm.slane %v1115, %v1151
    %v1182 = vperm.slane %v1116, %v1151
    %v1183 = vperm.slane %v1117, %v1151
    %v1184 = vsel %vm538, %v1153, %v1152
    %v1185 = vsel %vm541, %v1154, %v1184
    %v1186 = vsel %vm544, %v1155, %v1185
    %v1187 = vsel %vm538, %v1157, %v1156
    %v1188 = vsel %vm541, %v1158, %v1187
    %v1189 = vsel %vm544, %v1159, %v1188
    %v1190 = vsel %vm538, %v1161, %v1160
    %v1191 = vsel %vm541, %v1162, %v1190
    %v1192 = vsel %vm544, %v1163, %v1191
    %v1193 = vsel %vm538, %v1165, %v1164
    %v1194 = vsel %vm541, %v1166, %v1193
    %v1195 = vsel %vm544, %v1167, %v1194
    %v1196 = vsel %vm538, %v1169, %v1168
    %v1197 = vsel %vm541, %v1170, %v1196
    %v1198 = vsel %vm544, %v1171, %v1197
    %v1199 = vsel %vm538, %v1173, %v1172
    %v1200 = vsel %vm541, %v1174, %v1199
    %v1201 = vsel %vm544, %v1175, %v1200
    %v1202 = vsel %vm538, %v1177, %v1176
    %v1203 = vsel %vm541, %v1178, %v1202
    %v1204 = vsel %vm544, %v1179, %v1203
    %v1205 = vsel %vm538, %v1181, %v1180
    %v1206 = vsel %vm541, %v1182, %v1205
    %v1207 = vsel %vm544, %v1183, %v1206
    %v1216 = vrot.slane %v1192, 4
    %v1217 = vsel %vm765, %v1216, %v1186
    %v1219 = vunpack.c.l.s4 1983009808
    %v1220 = vunpack.c.0.s8 %v1219
    %v1221 = vperm.slane %v1217, %v1220
    %v1222 = vrot.slane %v1195, 4
    %v1223 = vsel %vm765, %v1222, %v1189
    %v1225 = vunpack.c.l.s4 1983009808
    %v1226 = vunpack.c.0.s8 %v1225
    %v1227 = vperm.slane %v1223, %v1226
    %v1228 = vrot.slane %v1227, 4
    %v1229 = vsel %vm765, %v1228, %v1221
    %v1230 = vrot.slane %v1221, 4
    %v1231 = vsel %vm765, %v1227, %v1230
    %v1233 = vunpack.c.l.s4 1934713408
    %v1234 = vunpack.c.0.s8 %v1233
    %v1235 = vperm.slane %v1229, %v1234
    %v1237 = vunpack.c.l.s4 1934713408
    %v1238 = vunpack.c.0.s8 %v1237
    %v1239 = vperm.slane %v1231, %v1238
    %v1240 = vrot.slane %v1235, 4
    %v1241 = vsel %vm765, 0.0, %v1240
    %v1242 = vrot.slane %v1239, 4
    %v1243 = vsel %vm765, 0.0, %v1242
    %v1244 = vrot.slane %v1204, 4
    %v1245 = vsel %vm765, %v1244, %v1198
    %v1247 = vunpack.c.l.s4 1983009808
    %v1248 = vunpack.c.0.s8 %v1247
    %v1249 = vperm.slane %v1245, %v1248
    %v1250 = vrot.slane %v1207, 4
    %v1251 = vsel %vm765, %v1250, %v1201
    %v1253 = vunpack.c.l.s4 1983009808
    %v1254 = vunpack.c.0.s8 %v1253
    %v1255 = vperm.slane %v1251, %v1254
    %v1256 = vrot.slane %v1255, 4
    %v1257 = vsel %vm765, %v1256, %v1249
    %v1258 = vrot.slane %v1249, 4
    %v1259 = vsel %vm765, %v1255, %v1258
    %v1261 = vunpack.c.l.s4 1934713408
    %v1262 = vunpack.c.0.s8 %v1261
    %v1263 = vperm.slane %v1257, %v1262
    %v1265 = vunpack.c.l.s4 1934713408
    %v1266 = vunpack.c.0.s8 %v1265
    %v1267 = vperm.slane %v1259, %v1266
    %v1268 = vrot.slane %v1263, 4
    %v1269 = vsel %vm765, 0.0, %v1268
    %v1270 = vrot.slane %v1267, 4
    %v1271 = vsel %vm765, 0.0, %v1270
    %1274 = vrot.lane.b32.xlu0 %v1241, 4
    %v1275 = vpop.permute.xlu0 %1274
    %1276 = vrot.lane.b32.xlu0 %v1269, 4
    %v1277 = vpop.permute.xlu0 %1276
    %1282 = vrot.lane.b32.xlu0 %v1239, 8
    %v1283 = vpop.permute.xlu0 %1282
    %1284 = vrot.lane.b32.xlu0 %v1267, 8
    %v1285 = vpop.permute.xlu0 %1284
    %1290 = vrot.lane.b32.xlu0 %v1243, 12
    %v1291 = vpop.permute.xlu0 %1290
    %1292 = vrot.lane.b32.xlu0 %v1271, 12
    %v1293 = vpop.permute.xlu0 %1292
    %vm1296 = vcmask 31744
    %v1297 = vsel %vm1296, %v1235, %v1275
    %v1298 = vsel %vm1296, %v1263, %v1277
    %vm1299 = vcmask 64512
    %v1300 = vsel %vm1299, %v1297, %v1283
    %v1301 = vsel %vm1299, %v1298, %v1285
    %vm1302 = vcmask 97280
    %v1303 = vsel %vm1302, %v1300, %v1291
    %v1304 = vsel %vm1302, %v1301, %v1293
    %1305 = vxpose.xlu0.b32.start [1/16] %v1303, 128
    %1306 = vxpose.xlu0.b32.cont [2/16] 0.0, 128
    %1307 = vxpose.xlu0.b32.cont [3/16] 0.0, 128
    %1308 = vxpose.xlu0.b32.cont [4/16] 0.0, 128
    %1309 = vxpose.xlu0.b32.cont [5/16] 0.0, 128
    %1310 = vxpose.xlu0.b32.cont [6/16] 0.0, 128
    %1311 = vxpose.xlu0.b32.cont [7/16] 0.0, 128
    %1312 = vxpose.xlu0.b32.cont [8/16] 0.0, 128
    %1313 = vxpose.xlu0.b32.cont [9/16] 0.0, 128
    %1314 = vxpose.xlu0.b32.cont [10/16] 0.0, 128
    %1315 = vxpose.xlu0.b32.cont [11/16] 0.0, 128
    %1316 = vxpose.xlu0.b32.cont [12/16] 0.0, 128
    %1317 = vxpose.xlu0.b32.cont [13/16] 0.0, 128
    %1318 = vxpose.xlu0.b32.cont [14/16] 0.0, 128
    %1319 = vxpose.xlu0.b32.cont [15/16] 0.0, 128
    %1320 = vxpose.xlu0.b32.end [16/16] 0.0, 128
    %v1321 = vpop.trf.xlu0
    %v1322 = vpop.trf.xlu0
    %v1323 = vpop.trf.xlu0
    %v1324 = vpop.trf.xlu0
    %v1325 = vpop.trf.xlu0
    %v1326 = vpop.trf.xlu0
    %v1327 = vpop.trf.xlu0
    %v1328 = vpop.trf.xlu0
    %v1329 = vpop.trf.xlu0
    %v1330 = vpop.trf.xlu0
    %v1331 = vpop.trf.xlu0
    %v1332 = vpop.trf.xlu0
    %v1333 = vpop.trf.xlu0
    %v1334 = vpop.trf.xlu0
    %v1335 = vpop.trf.xlu0
    %v1336 = vpop.trf.xlu0
    %1337 = vxpose.xlu0.b32.start [1/16] %v1304, 128
    %1338 = vxpose.xlu0.b32.cont [2/16] 0.0, 128
    %1339 = vxpose.xlu0.b32.cont [3/16] 0.0, 128
    %1340 = vxpose.xlu0.b32.cont [4/16] 0.0, 128
    %1341 = vxpose.xlu0.b32.cont [5/16] 0.0, 128
    %1342 = vxpose.xlu0.b32.cont [6/16] 0.0, 128
    %1343 = vxpose.xlu0.b32.cont [7/16] 0.0, 128
    %1344 = vxpose.xlu0.b32.cont [8/16] 0.0, 128
    %1345 = vxpose.xlu0.b32.cont [9/16] 0.0, 128
    %1346 = vxpose.xlu0.b32.cont [10/16] 0.0, 128
    %1347 = vxpose.xlu0.b32.cont [11/16] 0.0, 128
    %1348 = vxpose.xlu0.b32.cont [12/16] 0.0, 128
    %1349 = vxpose.xlu0.b32.cont [13/16] 0.0, 128
    %1350 = vxpose.xlu0.b32.cont [14/16] 0.0, 128
    %1351 = vxpose.xlu0.b32.cont [15/16] 0.0, 128
    %1352 = vxpose.xlu0.b32.end [16/16] 0.0, 128
    %v1353 = vpop.trf.xlu0
    %v1354 = vpop.trf.xlu0
    %v1355 = vpop.trf.xlu0
    %v1356 = vpop.trf.xlu0
    %v1357 = vpop.trf.xlu0
    %v1358 = vpop.trf.xlu0
    %v1359 = vpop.trf.xlu0
    %v1360 = vpop.trf.xlu0
    %v1361 = vpop.trf.xlu0
    %v1362 = vpop.trf.xlu0
    %v1363 = vpop.trf.xlu0
    %v1364 = vpop.trf.xlu0
    %v1365 = vpop.trf.xlu0
    %v1366 = vpop.trf.xlu0
    %v1367 = vpop.trf.xlu0
    %v1368 = vpop.trf.xlu0
    %v1369 = vmul.f32 %v1321, %v1321
    %v1370 = vmul.f32 %v1322, %v1322
    %v1371 = vmul.f32 %v1353, %v1353
    %v1372 = vmul.f32 %v1354, %v1354
    %v1373 = vsel %vm1296, %v1369, 0.0
    %1374 = vadd.xlane.f32.xlu0 %v1373
    %v1375 = vpop.xlane.xlu0 %1374
    %v1376 = vsel %vm1296, %v1370, 0.0
    %1377 = vadd.xlane.f32.xlu0 %v1376
    %v1378 = vpop.xlane.xlu0 %1377
    %v1379 = vsel %vm1296, %v1371, 0.0
    %1380 = vadd.xlane.f32.xlu0 %v1379
    %v1381 = vpop.xlane.xlu0 %1380
    %v1382 = vsel %vm1296, %v1372, 0.0
    %1383 = vadd.xlane.f32.xlu0 %v1382
    %v1384 = vpop.xlane.xlu0 %1383
    %v1385 = vrsqrt.pop %v1375
    %v1386 = vmul.f32 %v1385, %v1375
    %v1387 = vmul.f32 %v1386, %v1385
    %v1388 = vmul.f32 0.5, %v1387
    %v1389 = vsub.f32 1.5, %v1388
    %v1390 = vmul.f32 %v1385, %v1389
    %v1391 = vmul.f32 %v1375, %v1390
    %vm1392 = vcmp.eq.f32.partialorder %v1375, inf
    %v1393 = vsel %vm1392, %v1375, %v1391
    %vm1394 = vcmp.eq.f32.partialorder %v1375, 0.0
    %v1395 = vand.u32 %v1375, 2147483648
    %v1396 = vsel %vm1394, %v1395, %v1393
    %v1397 = vrsqrt.pop %v1378
    %v1398 = vmul.f32 %v1397, %v1378
    %v1399 = vmul.f32 %v1398, %v1397
    %v1400 = vmul.f32 0.5, %v1399
    %v1401 = vsub.f32 1.5, %v1400
    %v1402 = vmul.f32 %v1397, %v1401
    %v1403 = vmul.f32 %v1378, %v1402
    %vm1404 = vcmp.eq.f32.partialorder %v1378, inf
    %v1405 = vsel %vm1404, %v1378, %v1403
    %vm1406 = vcmp.eq.f32.partialorder %v1378, 0.0
    %v1407 = vand.u32 %v1378, 2147483648
    %v1408 = vsel %vm1406, %v1407, %v1405
    %v1409 = vrsqrt.pop %v1381
    %v1410 = vmul.f32 %v1409, %v1381
    %v1411 = vmul.f32 %v1410, %v1409
    %v1412 = vmul.f32 0.5, %v1411
    %v1413 = vsub.f32 1.5, %v1412
    %v1414 = vmul.f32 %v1409, %v1413
    %v1415 = vmul.f32 %v1381, %v1414
    %vm1416 = vcmp.eq.f32.partialorder %v1381, inf
    %v1417 = vsel %vm1416, %v1381, %v1415
    %vm1418 = vcmp.eq.f32.partialorder %v1381, 0.0
    %v1419 = vand.u32 %v1381, 2147483648
    %v1420 = vsel %vm1418, %v1419, %v1417
    %v1421 = vrsqrt.pop %v1384
    %v1422 = vmul.f32 %v1421, %v1384
    %v1423 = vmul.f32 %v1422, %v1421
    %v1424 = vmul.f32 0.5, %v1423
    %v1425 = vsub.f32 1.5, %v1424
    %v1426 = vmul.f32 %v1421, %v1425
    %v1427 = vmul.f32 %v1384, %v1426
    %vm1428 = vcmp.eq.f32.partialorder %v1384, inf
    %v1429 = vsel %vm1428, %v1384, %v1427
    %vm1430 = vcmp.eq.f32.partialorder %v1384, 0.0
    %v1431 = vand.u32 %v1384, 2147483648
    %v1432 = vsel %vm1430, %v1431, %v1429
    %v1433 = vadd.f32 %v1396, 1e-07
    %v1434 = vadd.f32 %v1408, 1e-07
    %v1435 = vadd.f32 %v1420, 1e-07
    %v1436 = vadd.f32 %v1432, 1e-07
    %v1437 = vrcp.pop %v1433
    %v1438 = vrcp.pop %v1434
    %v1439 = vrcp.pop %v1435
    %v1440 = vrcp.pop %v1436
    %v1441 = vmul.f32 %v1321, %v1437
    %v1442 = vmul.f32 %v1322, %v1438
    %v1443 = vmul.f32 %v1353, %v1439
    %v1444 = vmul.f32 %v1354, %v1440
    %1445 = vst.msk [vmem:[%s1] sm:$0xff] %vm1296, %v1441
    %1446 = vst.msk [vmem:[%s1 + $0x8] sm:$0xff] %vm1296, %v1442
    %1447 = vst.msk [vmem:[%s1 + $0x10] sm:$0xff] %vm1296, %v1443
    %1448 = vst.msk [vmem:[%s1 + $0x18] sm:$0xff] %vm1296, %v1444
    // Predicated region
    $region10: #{tpu_custom_call.1} parent=1 // pred_check
      _
    $region11: #{tpu_custom_call.1} parent=1 // pred_check_branch
      %1450 = sbr.rel (0) target = $region13
    $region12: #{tpu_custom_call.1} parent=1 // pred_region
      _
    $region13: #{tpu_custom_call.1} parent=1 // pred_fallthru
      _
    // Predicated region
    $region14: #{tpu_custom_call.1} parent=1 // pred_check
      _
    $region15: #{tpu_custom_call.1} parent=1 // pred_check_branch
      %1452 = sbr.rel (0) target = $region17
    $region16: #{tpu_custom_call.1} parent=1 // pred_region
      _
    $region17: #{tpu_custom_call.1} parent=1 // pred_fallthru
      _
    %1453 = vsyncpa [#allocation3], 1

</llo_original>
